<compile_context>
chip_gen: v6e
topology: v6e:2x2x1
jax: 0.10.0
libtpu: 0.0.40
codegen_flags: <defaults>
</compile_context>

<pallas_src>
import functools
import operator

import jax
import jax.numpy as jnp
from jax import lax
from jax.experimental import pallas as pl
from jax.experimental.pallas import tpu as pltpu

N = 16                       # PeakyLoss default; kernel is specialized to N = 16
P = N // 2                   # 8  : pool padding
K = N + 1                    # 17 : pool window
LANES = 128                  # canvas lane width (one vreg row)
MARGIN = P + 1               # 9  : zero margin needed by the 3x3 + 17-tap windows
INV_K2 = 1.0 / float(K * K)


def _win17_last(v, cmb):
    """Forward 17-wide window combine along the last (lane) axis (log doubling)."""
    n = v.shape[-1]
    w = cmb(v[..., 0:n - 1],  v[..., 1:n])        # window 2
    w = cmb(w[..., 0:n - 3],  w[..., 2:n - 1])    # window 4
    w = cmb(w[..., 0:n - 7],  w[..., 4:n - 3])    # window 8
    w = cmb(w[..., 0:n - 15], w[..., 8:n - 7])    # window 16
    w = cmb(w[..., 0:n - 16], v[..., 16:n])       # window 17
    return w


def _win17_rows(v, cmb):
    """Forward 17-wide window combine along the sublane (row) axis."""
    n = v.shape[-2]
    w = cmb(v[0:n - 1, :],  v[1:n, :])
    w = cmb(w[0:n - 3, :],  w[2:n - 1, :])
    w = cmb(w[0:n - 7, :],  w[4:n - 3, :])
    w = cmb(w[0:n - 15, :], w[8:n - 7, :])
    w = cmb(w[0:n - 16, :], v[16:n, :])
    return w


def _peaky_kernel(x_ref, out_ref, *, TB, H, W, cols):
    """x_ref: (TB, R, 128) lane-packed canvas; out_ref: (TB, H, LO) accumulator."""
    i = pl.program_id(1)

    @pl.when(i == 0)
    def _init():
        out_ref[...] = jnp.zeros(out_ref.shape, out_ref.dtype)

    HS = H + 2 * P            # rows of the 3x3 sums feeding the 17-tap windows
    LU = LANES - 2            # lanes of the 3x3 sums
    LO = LU - (K - 1)         # lanes of the window outputs (= out_ref lane width)

    # Per-step constants (no image axis), hoisted outside the image loop.
    ri = lax.broadcasted_iota(jnp.int32, (HS, LU), 0)
    ci = lax.broadcasted_iota(jnp.int32, (HS, LU), 1)
    row_ok = (ri >= P) & (ri < P + H)
    col_ok = functools.reduce(
        operator.or_, [(ci >= c - 1) & (ci < c - 1 + W) for c in cols])
    valid = row_ok & col_ok                          # "is a real preproc pixel"

    co = lax.broadcasted_iota(jnp.int32, (H, LO), 1)
    out_ok = functools.reduce(
        operator.or_, [(co >= c - MARGIN) & (co < c - MARGIN + W) for c in cols])

    def body(t, carry):
        x = x_ref[t]                                              # (R, 128)
        xr = x[0:HS + 2, :]                                       # rows feeding 3x3
        # separable, unscaled 3x3 box sum (zero padding comes from canvas zeros)
        rw = xr[:, 0:LU] + xr[:, 1:LU + 1] + xr[:, 2:LU + 2]      # (HS+2, 126)
        s3 = rw[0:HS, :] + rw[1:HS + 1, :] + rw[2:HS + 2, :]      # (HS,   126)
        # pool-padding semantics: 0 for the avg pool, -inf for the max pool
        s3z = jnp.where(valid, s3, 0.0)
        s3n = jnp.where(valid, s3, -jnp.inf)
        rs = _win17_last(s3z, jnp.add)                            # (HS, 110)
        rm = _win17_last(s3n, jnp.maximum)
        cs = _win17_rows(rs, jnp.add)                             # (H,  110)
        cm = _win17_rows(rm, jnp.maximum)
        d = cm - cs * INV_K2                                      # 9*(max - avg)
        d = jnp.where(out_ok, d, 0.0)                             # drop inter-image lanes
        out_ref[t] = out_ref[t] + d
        return carry

    lax.fori_loop(0, TB, body, 0, unroll=True)


def peaky_loss(sali1, sali2):
    """PeakyLoss.forward(repeatability=(sali1, sali2)) with N = 16."""
    assert sali1.shape == sali2.shape, "both saliency maps must share a shape"
    B, C, H, W = sali1.shape
    assert W + 2 * MARGIN <= LANES, "lane-packed kernel supports W <= 110"
    BC = B * C
    M = 2 * BC                                        # both maps merged
    x = jnp.concatenate([sali1.reshape(BC, H, W),
                         sali2.reshape(BC, H, W)], axis=0).astype(jnp.float32)

    SEG = W + MARGIN                                  # per-image lane segment (guard >= 9)
    g_max = 1 + (LANES - 2 * MARGIN - W) // SEG       # images per 128-lane row-block
    G = max(1, min(g_max, -(-M // 2)))                # keep >= 2 row-blocks when M >= 2
    NB = -(-M // G)                                   # row-blocks
    par = 2 if NB >= 2 else 1                         # v7x: feed both TensorCores
    NBp = -(-NB // par)                               # row-blocks per parallel slice
    TB = min(NBp, 4)                                  # row-blocks per grid step
    cpp = -(-NBp // TB)                               # inner grid steps
    NBtot = par * cpp * TB
    Mpad = NBtot * G

    # Zero-padded images contribute exactly 0 to the (max - avg) sum.
    if Mpad > M:
        x = jnp.concatenate([x, jnp.zeros((Mpad - M, H, W), jnp.float32)], 0)

    # Wrapper-side canvas: (NBtot, R, 128); image g of a row-block sits at
    # rows [MARGIN, MARGIN+H), cols [MARGIN + g*SEG, MARGIN + g*SEG + W).
    R = -(-(H + 2 * MARGIN) // 8) * 8
    x = x.reshape(NBtot, G, H, W)
    x = jnp.pad(x, ((0, 0), (0, 0), (0, 0), (0, SEG - W)))
    x = jnp.transpose(x, (0, 2, 1, 3)).reshape(NBtot, H, G * SEG)
    x = jnp.pad(x, ((0, 0), (MARGIN, R - MARGIN - H),
                    (MARGIN, LANES - MARGIN - G * SEG)))

    LO = LANES - 2 - (K - 1)
    cols = tuple(MARGIN + g * SEG for g in range(G))
    kernel = functools.partial(_peaky_kernel, TB=TB, H=H, W=W, cols=cols)

    acc = pl.pallas_call(
        kernel,
        out_shape=jax.ShapeDtypeStruct((par, TB, H, LO), jnp.float32),
        grid_spec=pltpu.PrefetchScalarGridSpec(
            num_scalar_prefetch=0,
            grid=(par, cpp),
            in_specs=[pl.BlockSpec((TB, R, LANES),
                                   lambda c, i: (c * cpp + i, 0, 0))],
            out_specs=pl.BlockSpec((None, TB, H, LO),
                                   lambda c, i: (c, 0, 0, 0)),
        ),
        compiler_params=pltpu.CompilerParams(
            dimension_semantics=("parallel", "arbitrary")),
    )(x)

    # acc holds 9*(maxpool - avgpool); with equal shapes,
    # (mean1 + mean2)/2 == (sum1 + sum2) / (2*BC*H*W).
    return 1.0 - jnp.sum(acc) / (9.0 * M * H * W)


def _reference_peaky_loss(sali1, sali2):
    """Pure-JAX reference mirroring the PyTorch module exactly."""
    def pool(x, k, pad, op, init):
        return lax.reduce_window(
            x, init, op, (1, 1, k, k), (1, 1, 1, 1),
            [(0, 0), (0, 0), (pad, pad), (pad, pad)])

    def one(s):
        s = s.astype(jnp.float32)
        y = pool(s, 3, 1, lax.add, 0.0) / 9.0
        mx = pool(y, K, P, lax.max, -jnp.inf)
        av = pool(y, K, P, lax.add, 0.0) / float(K * K)
        return 1.0 - jnp.mean(mx - av)

    return 0.5 * (one(sali1) + one(sali2))


if __name__ == "__main__":
    key = jax.random.PRNGKey(0)
    k1, k2, k3, k4 = jax.random.split(key, 4)

    # Case 1: B*C = 8 -> 16 packed images, 4 row-blocks, both grid axes used.
    s1 = jax.random.uniform(k1, (2, 4, 16, 16), dtype=jnp.float32)
    s2 = jax.random.uniform(k2, (2, 4, 16, 16), dtype=jnp.float32)
    loss = jax.jit(peaky_loss)(s1, s2)
    jax.block_until_ready(loss)
    ref = _reference_peaky_loss(s1, s2)
    assert jnp.allclose(loss, ref, rtol=1e-4, atol=1e-4), (float(loss), float(ref))

    # Case 2: odd batch -> zero-padded images / row-blocks and a multi-step
    # inner grid axis (accumulator revisited across steps).
    s3 = jax.random.uniform(k3, (4, 5, 16, 16), dtype=jnp.float32)
    s4 = jax.random.uniform(k4, (4, 5, 16, 16), dtype=jnp.float32)
    loss2 = jax.jit(peaky_loss)(s3, s4)
    jax.block_until_ready(loss2)
    ref2 = _reference_peaky_loss(s3, s4)
    assert jnp.allclose(loss2, ref2, rtol=1e-4, atol=1e-4), (float(loss2), float(ref2))

    print("KERNEL_OK")
</pallas_src>

<mosaic_0001>
module attributes {stable_mosaic.version = 11 : i64} {
  func.func @_peaky_kernel(%arg0: i32, %arg1: i32, %arg2: memref<2x40x128xf32, #tpu.memory_space<vmem>>, %arg3: memref<1x2x16x110xf32, #tpu.memory_space<vmem>>) attributes {dimension_semantics = [#tpu.dimension_semantics<parallel>, #tpu.dimension_semantics<arbitrary>], iteration_bounds = array<i64: 2, 1>, scalar_prefetch = 0 : i64, scratch_operands = 0 : i64, tpu.core_type = #tpu.core_type<tc>, window_params = [{transform_indices = @transform_0, window_bounds = array<i64: 2, 40, 128>}, {transform_indices = @transform_1, window_bounds = array<i64: 1, 2, 16, 110>}]} {
    %c0_i32 = arith.constant 0 : i32
    %0 = arith.cmpi eq, %arg1, %c0_i32 : i32
    %1 = arith.extui %0 : i1 to i32
    %c0_i32_0 = arith.constant 0 : i32
    %2 = arith.cmpi ne, %1, %c0_i32_0 : i32
    scf.if %2 {
      %cst_27 = arith.constant 0.000000e+00 : f32
      %240 = vector.broadcast %cst_27 : f32 to vector<2x16x110xf32>
      %c0_28 = arith.constant 0 : index
      %c0_29 = arith.constant 0 : index
      %c0_30 = arith.constant 0 : index
      %c0_31 = arith.constant 0 : index
      %241 = vector.load %arg3[%c0_28, %c0_29, %c0_30, %c0_31] : memref<1x2x16x110xf32, #tpu.memory_space<vmem>>, vector<1x2x16x110xf32>
      %242 = vector.shape_cast %241 : vector<1x2x16x110xf32> to vector<2x16x110xf32>
      %243 = vector.shape_cast %240 : vector<2x16x110xf32> to vector<1x2x16x110xf32>
      tpu.vector_store %arg3[%c0_28, %c0_29, %c0_30, %c0_31], %243 {strides = array<i32>} : memref<1x2x16x110xf32, #tpu.memory_space<vmem>>, vector<1x2x16x110xf32>,
    } else {
    }
    %3 = tpu.iota {dimensions = array<i32: 0>} : vector<32x126xi32>
    %4 = tpu.iota {dimensions = array<i32: 1>} : vector<32x126xi32>
    %c8_i32 = arith.constant 8 : i32
    %5 = vector.broadcast %c8_i32 : i32 to vector<32x126xi32>
    %6 = arith.cmpi sge, %3, %5 : vector<32x126xi32>
    %c24_i32 = arith.constant 24 : i32
    %7 = vector.broadcast %c24_i32 : i32 to vector<32x126xi32>
    %8 = arith.cmpi slt, %3, %7 : vector<32x126xi32>
    %9 = arith.andi %6, %8 : vector<32x126xi1>
    %c8_i32_1 = arith.constant 8 : i32
    %10 = vector.broadcast %c8_i32_1 : i32 to vector<32x126xi32>
    %11 = arith.cmpi sge, %4, %10 : vector<32x126xi32>
    %c24_i32_2 = arith.constant 24 : i32
    %12 = vector.broadcast %c24_i32_2 : i32 to vector<32x126xi32>
    %13 = arith.cmpi slt, %4, %12 : vector<32x126xi32>
    %14 = arith.andi %11, %13 : vector<32x126xi1>
    %c33_i32 = arith.constant 33 : i32
    %15 = vector.broadcast %c33_i32 : i32 to vector<32x126xi32>
    %16 = arith.cmpi sge, %4, %15 : vector<32x126xi32>
    %c49_i32 = arith.constant 49 : i32
    %17 = vector.broadcast %c49_i32 : i32 to vector<32x126xi32>
    %18 = arith.cmpi slt, %4, %17 : vector<32x126xi32>
    %19 = arith.andi %16, %18 : vector<32x126xi1>
    %c58_i32 = arith.constant 58 : i32
    %20 = vector.broadcast %c58_i32 : i32 to vector<32x126xi32>
    %21 = arith.cmpi sge, %4, %20 : vector<32x126xi32>
    %c74_i32 = arith.constant 74 : i32
    %22 = vector.broadcast %c74_i32 : i32 to vector<32x126xi32>
    %23 = arith.cmpi slt, %4, %22 : vector<32x126xi32>
    %24 = arith.andi %21, %23 : vector<32x126xi1>
    %c83_i32 = arith.constant 83 : i32
    %25 = vector.broadcast %c83_i32 : i32 to vector<32x126xi32>
    %26 = arith.cmpi sge, %4, %25 : vector<32x126xi32>
    %c99_i32 = arith.constant 99 : i32
    %27 = vector.broadcast %c99_i32 : i32 to vector<32x126xi32>
    %28 = arith.cmpi slt, %4, %27 : vector<32x126xi32>
    %29 = arith.andi %26, %28 : vector<32x126xi1>
    %30 = arith.ori %14, %19 : vector<32x126xi1>
    %31 = arith.ori %30, %24 : vector<32x126xi1>
    %32 = arith.ori %31, %29 : vector<32x126xi1>
    %33 = arith.andi %9, %32 : vector<32x126xi1>
    %34 = tpu.iota {dimensions = array<i32: 1>} : vector<16x110xi32>
    %c0_i32_3 = arith.constant 0 : i32
    %35 = vector.broadcast %c0_i32_3 : i32 to vector<16x110xi32>
    %36 = arith.cmpi sge, %34, %35 : vector<16x110xi32>
    %c16_i32 = arith.constant 16 : i32
    %37 = vector.broadcast %c16_i32 : i32 to vector<16x110xi32>
    %38 = arith.cmpi slt, %34, %37 : vector<16x110xi32>
    %39 = arith.andi %36, %38 : vector<16x110xi1>
    %c25_i32 = arith.constant 25 : i32
    %40 = vector.broadcast %c25_i32 : i32 to vector<16x110xi32>
    %41 = arith.cmpi sge, %34, %40 : vector<16x110xi32>
    %c41_i32 = arith.constant 41 : i32
    %42 = vector.broadcast %c41_i32 : i32 to vector<16x110xi32>
    %43 = arith.cmpi slt, %34, %42 : vector<16x110xi32>
    %44 = arith.andi %41, %43 : vector<16x110xi1>
    %c50_i32 = arith.constant 50 : i32
    %45 = vector.broadcast %c50_i32 : i32 to vector<16x110xi32>
    %46 = arith.cmpi sge, %34, %45 : vector<16x110xi32>
    %c66_i32 = arith.constant 66 : i32
    %47 = vector.broadcast %c66_i32 : i32 to vector<16x110xi32>
    %48 = arith.cmpi slt, %34, %47 : vector<16x110xi32>
    %49 = arith.andi %46, %48 : vector<16x110xi1>
    %c75_i32 = arith.constant 75 : i32
    %50 = vector.broadcast %c75_i32 : i32 to vector<16x110xi32>
    %51 = arith.cmpi sge, %34, %50 : vector<16x110xi32>
    %c91_i32 = arith.constant 91 : i32
    %52 = vector.broadcast %c91_i32 : i32 to vector<16x110xi32>
    %53 = arith.cmpi slt, %34, %52 : vector<16x110xi32>
    %54 = arith.andi %51, %53 : vector<16x110xi1>
    %55 = arith.ori %39, %44 : vector<16x110xi1>
    %56 = arith.ori %55, %49 : vector<16x110xi1>
    %57 = arith.ori %56, %54 : vector<16x110xi1>
    %c0_i32_4 = arith.constant 0 : i32
    %58 = arith.index_cast %c0_i32_4 : i32 to index
    %c0 = arith.constant 0 : index
    %c0_5 = arith.constant 0 : index
    %59 = vector.load %arg2[%58, %c0, %c0_5] : memref<2x40x128xf32, #tpu.memory_space<vmem>>, vector<1x40x128xf32>
    %60 = vector.shape_cast %59 : vector<1x40x128xf32> to vector<40x128xf32>
    %61 = vector.extract_strided_slice %60 {offsets = [0, 0], sizes = [34, 128], strides = [1, 1]} : vector<40x128xf32> to vector<34x128xf32>
    %62 = vector.extract_strided_slice %61 {offsets = [0, 0], sizes = [34, 126], strides = [1, 1]} : vector<34x128xf32> to vector<34x126xf32>
    %63 = vector.extract_strided_slice %61 {offsets = [0, 1], sizes = [34, 126], strides = [1, 1]} : vector<34x128xf32> to vector<34x126xf32>
    %64 = arith.addf %62, %63 : vector<34x126xf32>
    %65 = vector.extract_strided_slice %61 {offsets = [0, 2], sizes = [34, 126], strides = [1, 1]} : vector<34x128xf32> to vector<34x126xf32>
    %66 = arith.addf %64, %65 : vector<34x126xf32>
    %67 = vector.extract_strided_slice %66 {offsets = [0, 0], sizes = [32, 126], strides = [1, 1]} : vector<34x126xf32> to vector<32x126xf32>
    %68 = vector.extract_strided_slice %66 {offsets = [1, 0], sizes = [32, 126], strides = [1, 1]} : vector<34x126xf32> to vector<32x126xf32>
    %69 = arith.addf %67, %68 : vector<32x126xf32>
    %70 = vector.extract_strided_slice %66 {offsets = [2, 0], sizes = [32, 126], strides = [1, 1]} : vector<34x126xf32> to vector<32x126xf32>
    %71 = arith.addf %69, %70 : vector<32x126xf32>
    %cst = arith.constant 0.000000e+00 : f32
    %72 = vector.broadcast %cst : f32 to vector<32x126xf32>
    %73 = arith.select %33, %71, %72 : vector<32x126xi1>, vector<32x126xf32>
    %cst_6 = arith.constant 0xFF800000 : f32
    %74 = vector.broadcast %cst_6 : f32 to vector<32x126xf32>
    %75 = arith.select %33, %71, %74 : vector<32x126xi1>, vector<32x126xf32>
    %76 = vector.extract_strided_slice %73 {offsets = [0, 0], sizes = [32, 125], strides = [1, 1]} : vector<32x126xf32> to vector<32x125xf32>
    %77 = vector.extract_strided_slice %73 {offsets = [0, 1], sizes = [32, 125], strides = [1, 1]} : vector<32x126xf32> to vector<32x125xf32>
    %78 = arith.addf %76, %77 : vector<32x125xf32>
    %79 = vector.extract_strided_slice %78 {offsets = [0, 0], sizes = [32, 123], strides = [1, 1]} : vector<32x125xf32> to vector<32x123xf32>
    %80 = vector.extract_strided_slice %78 {offsets = [0, 2], sizes = [32, 123], strides = [1, 1]} : vector<32x125xf32> to vector<32x123xf32>
    %81 = arith.addf %79, %80 : vector<32x123xf32>
    %82 = vector.extract_strided_slice %81 {offsets = [0, 0], sizes = [32, 119], strides = [1, 1]} : vector<32x123xf32> to vector<32x119xf32>
    %83 = vector.extract_strided_slice %81 {offsets = [0, 4], sizes = [32, 119], strides = [1, 1]} : vector<32x123xf32> to vector<32x119xf32>
    %84 = arith.addf %82, %83 : vector<32x119xf32>
    %85 = vector.extract_strided_slice %84 {offsets = [0, 0], sizes = [32, 111], strides = [1, 1]} : vector<32x119xf32> to vector<32x111xf32>
    %86 = vector.extract_strided_slice %84 {offsets = [0, 8], sizes = [32, 111], strides = [1, 1]} : vector<32x119xf32> to vector<32x111xf32>
    %87 = arith.addf %85, %86 : vector<32x111xf32>
    %88 = vector.extract_strided_slice %87 {offsets = [0, 0], sizes = [32, 110], strides = [1, 1]} : vector<32x111xf32> to vector<32x110xf32>
    %89 = vector.extract_strided_slice %73 {offsets = [0, 16], sizes = [32, 110], strides = [1, 1]} : vector<32x126xf32> to vector<32x110xf32>
    %90 = arith.addf %88, %89 : vector<32x110xf32>
    %91 = vector.extract_strided_slice %75 {offsets = [0, 0], sizes = [32, 125], strides = [1, 1]} : vector<32x126xf32> to vector<32x125xf32>
    %92 = vector.extract_strided_slice %75 {offsets = [0, 1], sizes = [32, 125], strides = [1, 1]} : vector<32x126xf32> to vector<32x125xf32>
    %93 = arith.maximumf %91, %92 : vector<32x125xf32>
    %94 = vector.extract_strided_slice %93 {offsets = [0, 0], sizes = [32, 123], strides = [1, 1]} : vector<32x125xf32> to vector<32x123xf32>
    %95 = vector.extract_strided_slice %93 {offsets = [0, 2], sizes = [32, 123], strides = [1, 1]} : vector<32x125xf32> to vector<32x123xf32>
    %96 = arith.maximumf %94, %95 : vector<32x123xf32>
    %97 = vector.extract_strided_slice %96 {offsets = [0, 0], sizes = [32, 119], strides = [1, 1]} : vector<32x123xf32> to vector<32x119xf32>
    %98 = vector.extract_strided_slice %96 {offsets = [0, 4], sizes = [32, 119], strides = [1, 1]} : vector<32x123xf32> to vector<32x119xf32>
    %99 = arith.maximumf %97, %98 : vector<32x119xf32>
    %100 = vector.extract_strided_slice %99 {offsets = [0, 0], sizes = [32, 111], strides = [1, 1]} : vector<32x119xf32> to vector<32x111xf32>
    %101 = vector.extract_strided_slice %99 {offsets = [0, 8], sizes = [32, 111], strides = [1, 1]} : vector<32x119xf32> to vector<32x111xf32>
    %102 = arith.maximumf %100, %101 : vector<32x111xf32>
    %103 = vector.extract_strided_slice %102 {offsets = [0, 0], sizes = [32, 110], strides = [1, 1]} : vector<32x111xf32> to vector<32x110xf32>
    %104 = vector.extract_strided_slice %75 {offsets = [0, 16], sizes = [32, 110], strides = [1, 1]} : vector<32x126xf32> to vector<32x110xf32>
    %105 = arith.maximumf %103, %104 : vector<32x110xf32>
    %106 = vector.extract_strided_slice %90 {offsets = [0, 0], sizes = [31, 110], strides = [1, 1]} : vector<32x110xf32> to vector<31x110xf32>
    %107 = vector.extract_strided_slice %90 {offsets = [1, 0], sizes = [31, 110], strides = [1, 1]} : vector<32x110xf32> to vector<31x110xf32>
    %108 = arith.addf %106, %107 : vector<31x110xf32>
    %109 = vector.extract_strided_slice %108 {offsets = [0, 0], sizes = [29, 110], strides = [1, 1]} : vector<31x110xf32> to vector<29x110xf32>
    %110 = vector.extract_strided_slice %108 {offsets = [2, 0], sizes = [29, 110], strides = [1, 1]} : vector<31x110xf32> to vector<29x110xf32>
    %111 = arith.addf %109, %110 : vector<29x110xf32>
    %112 = vector.extract_strided_slice %111 {offsets = [0, 0], sizes = [25, 110], strides = [1, 1]} : vector<29x110xf32> to vector<25x110xf32>
    %113 = vector.extract_strided_slice %111 {offsets = [4, 0], sizes = [25, 110], strides = [1, 1]} : vector<29x110xf32> to vector<25x110xf32>
    %114 = arith.addf %112, %113 : vector<25x110xf32>
    %115 = vector.extract_strided_slice %114 {offsets = [0, 0], sizes = [17, 110], strides = [1, 1]} : vector<25x110xf32> to vector<17x110xf32>
    %116 = vector.extract_strided_slice %114 {offsets = [8, 0], sizes = [17, 110], strides = [1, 1]} : vector<25x110xf32> to vector<17x110xf32>
    %117 = arith.addf %115, %116 : vector<17x110xf32>
    %118 = vector.extract_strided_slice %117 {offsets = [0, 0], sizes = [16, 110], strides = [1, 1]} : vector<17x110xf32> to vector<16x110xf32>
    %119 = vector.extract_strided_slice %90 {offsets = [16, 0], sizes = [16, 110], strides = [1, 1]} : vector<32x110xf32> to vector<16x110xf32>
    %120 = arith.addf %118, %119 : vector<16x110xf32>
    %121 = vector.extract_strided_slice %105 {offsets = [0, 0], sizes = [31, 110], strides = [1, 1]} : vector<32x110xf32> to vector<31x110xf32>
    %122 = vector.extract_strided_slice %105 {offsets = [1, 0], sizes = [31, 110], strides = [1, 1]} : vector<32x110xf32> to vector<31x110xf32>
    %123 = arith.maximumf %121, %122 : vector<31x110xf32>
    %124 = vector.extract_strided_slice %123 {offsets = [0, 0], sizes = [29, 110], strides = [1, 1]} : vector<31x110xf32> to vector<29x110xf32>
    %125 = vector.extract_strided_slice %123 {offsets = [2, 0], sizes = [29, 110], strides = [1, 1]} : vector<31x110xf32> to vector<29x110xf32>
    %126 = arith.maximumf %124, %125 : vector<29x110xf32>
    %127 = vector.extract_strided_slice %126 {offsets = [0, 0], sizes = [25, 110], strides = [1, 1]} : vector<29x110xf32> to vector<25x110xf32>
    %128 = vector.extract_strided_slice %126 {offsets = [4, 0], sizes = [25, 110], strides = [1, 1]} : vector<29x110xf32> to vector<25x110xf32>
    %129 = arith.maximumf %127, %128 : vector<25x110xf32>
    %130 = vector.extract_strided_slice %129 {offsets = [0, 0], sizes = [17, 110], strides = [1, 1]} : vector<25x110xf32> to vector<17x110xf32>
    %131 = vector.extract_strided_slice %129 {offsets = [8, 0], sizes = [17, 110], strides = [1, 1]} : vector<25x110xf32> to vector<17x110xf32>
    %132 = arith.maximumf %130, %131 : vector<17x110xf32>
    %133 = vector.extract_strided_slice %132 {offsets = [0, 0], sizes = [16, 110], strides = [1, 1]} : vector<17x110xf32> to vector<16x110xf32>
    %134 = vector.extract_strided_slice %105 {offsets = [16, 0], sizes = [16, 110], strides = [1, 1]} : vector<32x110xf32> to vector<16x110xf32>
    %135 = arith.maximumf %133, %134 : vector<16x110xf32>
    %cst_7 = arith.constant 0.00346020772 : f32
    %136 = vector.broadcast %cst_7 : f32 to vector<16x110xf32>
    %137 = arith.mulf %120, %136 : vector<16x110xf32>
    %138 = arith.subf %135, %137 : vector<16x110xf32>
    %cst_8 = arith.constant 0.000000e+00 : f32
    %139 = vector.broadcast %cst_8 : f32 to vector<16x110xf32>
    %140 = arith.select %57, %138, %139 : vector<16x110xi1>, vector<16x110xf32>
    %c0_9 = arith.constant 0 : index
    %141 = arith.index_cast %c0_i32_4 : i32 to index
    %c0_10 = arith.constant 0 : index
    %c0_11 = arith.constant 0 : index
    %142 = vector.load %arg3[%c0_9, %141, %c0_10, %c0_11] : memref<1x2x16x110xf32, #tpu.memory_space<vmem>>, vector<1x1x16x110xf32>
    %143 = vector.shape_cast %142 : vector<1x1x16x110xf32> to vector<16x110xf32>
    %144 = arith.addf %143, %140 : vector<16x110xf32>
    %c0_12 = arith.constant 0 : index
    %145 = arith.index_cast %c0_i32_4 : i32 to index
    %c0_13 = arith.constant 0 : index
    %c0_14 = arith.constant 0 : index
    %146 = vector.load %arg3[%c0_12, %145, %c0_13, %c0_14] : memref<1x2x16x110xf32, #tpu.memory_space<vmem>>, vector<1x1x16x110xf32>
    %147 = vector.shape_cast %146 : vector<1x1x16x110xf32> to vector<16x110xf32>
    %148 = vector.shape_cast %144 : vector<16x110xf32> to vector<1x1x16x110xf32>
    tpu.vector_store %arg3[%c0_12, %145, %c0_13, %c0_14], %148 {strides = array<i32>} : memref<1x2x16x110xf32, #tpu.memory_space<vmem>>, vector<1x1x16x110xf32>,
    %c1_i32 = arith.constant 1 : i32
    %149 = arith.index_cast %c1_i32 : i32 to index
    %c0_15 = arith.constant 0 : index
    %c0_16 = arith.constant 0 : index
    %150 = vector.load %arg2[%149, %c0_15, %c0_16] : memref<2x40x128xf32, #tpu.memory_space<vmem>>, vector<1x40x128xf32>
    %151 = vector.shape_cast %150 : vector<1x40x128xf32> to vector<40x128xf32>
    %152 = vector.extract_strided_slice %151 {offsets = [0, 0], sizes = [34, 128], strides = [1, 1]} : vector<40x128xf32> to vector<34x128xf32>
    %153 = vector.extract_strided_slice %152 {offsets = [0, 0], sizes = [34, 126], strides = [1, 1]} : vector<34x128xf32> to vector<34x126xf32>
    %154 = vector.extract_strided_slice %152 {offsets = [0, 1], sizes = [34, 126], strides = [1, 1]} : vector<34x128xf32> to vector<34x126xf32>
    %155 = arith.addf %153, %154 : vector<34x126xf32>
    %156 = vector.extract_strided_slice %152 {offsets = [0, 2], sizes = [34, 126], strides = [1, 1]} : vector<34x128xf32> to vector<34x126xf32>
    %157 = arith.addf %155, %156 : vector<34x126xf32>
    %158 = vector.extract_strided_slice %157 {offsets = [0, 0], sizes = [32, 126], strides = [1, 1]} : vector<34x126xf32> to vector<32x126xf32>
    %159 = vector.extract_strided_slice %157 {offsets = [1, 0], sizes = [32, 126], strides = [1, 1]} : vector<34x126xf32> to vector<32x126xf32>
    %160 = arith.addf %158, %159 : vector<32x126xf32>
    %161 = vector.extract_strided_slice %157 {offsets = [2, 0], sizes = [32, 126], strides = [1, 1]} : vector<34x126xf32> to vector<32x126xf32>
    %162 = arith.addf %160, %161 : vector<32x126xf32>
    %cst_17 = arith.constant 0.000000e+00 : f32
    %163 = vector.broadcast %cst_17 : f32 to vector<32x126xf32>
    %164 = arith.select %33, %162, %163 : vector<32x126xi1>, vector<32x126xf32>
    %cst_18 = arith.constant 0xFF800000 : f32
    %165 = vector.broadcast %cst_18 : f32 to vector<32x126xf32>
    %166 = arith.select %33, %162, %165 : vector<32x126xi1>, vector<32x126xf32>
    %167 = vector.extract_strided_slice %164 {offsets = [0, 0], sizes = [32, 125], strides = [1, 1]} : vector<32x126xf32> to vector<32x125xf32>
    %168 = vector.extract_strided_slice %164 {offsets = [0, 1], sizes = [32, 125], strides = [1, 1]} : vector<32x126xf32> to vector<32x125xf32>
    %169 = arith.addf %167, %168 : vector<32x125xf32>
    %170 = vector.extract_strided_slice %169 {offsets = [0, 0], sizes = [32, 123], strides = [1, 1]} : vector<32x125xf32> to vector<32x123xf32>
    %171 = vector.extract_strided_slice %169 {offsets = [0, 2], sizes = [32, 123], strides = [1, 1]} : vector<32x125xf32> to vector<32x123xf32>
    %172 = arith.addf %170, %171 : vector<32x123xf32>
    %173 = vector.extract_strided_slice %172 {offsets = [0, 0], sizes = [32, 119], strides = [1, 1]} : vector<32x123xf32> to vector<32x119xf32>
    %174 = vector.extract_strided_slice %172 {offsets = [0, 4], sizes = [32, 119], strides = [1, 1]} : vector<32x123xf32> to vector<32x119xf32>
    %175 = arith.addf %173, %174 : vector<32x119xf32>
    %176 = vector.extract_strided_slice %175 {offsets = [0, 0], sizes = [32, 111], strides = [1, 1]} : vector<32x119xf32> to vector<32x111xf32>
    %177 = vector.extract_strided_slice %175 {offsets = [0, 8], sizes = [32, 111], strides = [1, 1]} : vector<32x119xf32> to vector<32x111xf32>
    %178 = arith.addf %176, %177 : vector<32x111xf32>
    %179 = vector.extract_strided_slice %178 {offsets = [0, 0], sizes = [32, 110], strides = [1, 1]} : vector<32x111xf32> to vector<32x110xf32>
    %180 = vector.extract_strided_slice %164 {offsets = [0, 16], sizes = [32, 110], strides = [1, 1]} : vector<32x126xf32> to vector<32x110xf32>
    %181 = arith.addf %179, %180 : vector<32x110xf32>
    %182 = vector.extract_strided_slice %166 {offsets = [0, 0], sizes = [32, 125], strides = [1, 1]} : vector<32x126xf32> to vector<32x125xf32>
    %183 = vector.extract_strided_slice %166 {offsets = [0, 1], sizes = [32, 125], strides = [1, 1]} : vector<32x126xf32> to vector<32x125xf32>
    %184 = arith.maximumf %182, %183 : vector<32x125xf32>
    %185 = vector.extract_strided_slice %184 {offsets = [0, 0], sizes = [32, 123], strides = [1, 1]} : vector<32x125xf32> to vector<32x123xf32>
    %186 = vector.extract_strided_slice %184 {offsets = [0, 2], sizes = [32, 123], strides = [1, 1]} : vector<32x125xf32> to vector<32x123xf32>
    %187 = arith.maximumf %185, %186 : vector<32x123xf32>
    %188 = vector.extract_strided_slice %187 {offsets = [0, 0], sizes = [32, 119], strides = [1, 1]} : vector<32x123xf32> to vector<32x119xf32>
    %189 = vector.extract_strided_slice %187 {offsets = [0, 4], sizes = [32, 119], strides = [1, 1]} : vector<32x123xf32> to vector<32x119xf32>
    %190 = arith.maximumf %188, %189 : vector<32x119xf32>
    %191 = vector.extract_strided_slice %190 {offsets = [0, 0], sizes = [32, 111], strides = [1, 1]} : vector<32x119xf32> to vector<32x111xf32>
    %192 = vector.extract_strided_slice %190 {offsets = [0, 8], sizes = [32, 111], strides = [1, 1]} : vector<32x119xf32> to vector<32x111xf32>
    %193 = arith.maximumf %191, %192 : vector<32x111xf32>
    %194 = vector.extract_strided_slice %193 {offsets = [0, 0], sizes = [32, 110], strides = [1, 1]} : vector<32x111xf32> to vector<32x110xf32>
    %195 = vector.extract_strided_slice %166 {offsets = [0, 16], sizes = [32, 110], strides = [1, 1]} : vector<32x126xf32> to vector<32x110xf32>
    %196 = arith.maximumf %194, %195 : vector<32x110xf32>
    %197 = vector.extract_strided_slice %181 {offsets = [0, 0], sizes = [31, 110], strides = [1, 1]} : vector<32x110xf32> to vector<31x110xf32>
    %198 = vector.extract_strided_slice %181 {offsets = [1, 0], sizes = [31, 110], strides = [1, 1]} : vector<32x110xf32> to vector<31x110xf32>
    %199 = arith.addf %197, %198 : vector<31x110xf32>
    %200 = vector.extract_strided_slice %199 {offsets = [0, 0], sizes = [29, 110], strides = [1, 1]} : vector<31x110xf32> to vector<29x110xf32>
    %201 = vector.extract_strided_slice %199 {offsets = [2, 0], sizes = [29, 110], strides = [1, 1]} : vector<31x110xf32> to vector<29x110xf32>
    %202 = arith.addf %200, %201 : vector<29x110xf32>
    %203 = vector.extract_strided_slice %202 {offsets = [0, 0], sizes = [25, 110], strides = [1, 1]} : vector<29x110xf32> to vector<25x110xf32>
    %204 = vector.extract_strided_slice %202 {offsets = [4, 0], sizes = [25, 110], strides = [1, 1]} : vector<29x110xf32> to vector<25x110xf32>
    %205 = arith.addf %203, %204 : vector<25x110xf32>
    %206 = vector.extract_strided_slice %205 {offsets = [0, 0], sizes = [17, 110], strides = [1, 1]} : vector<25x110xf32> to vector<17x110xf32>
    %207 = vector.extract_strided_slice %205 {offsets = [8, 0], sizes = [17, 110], strides = [1, 1]} : vector<25x110xf32> to vector<17x110xf32>
    %208 = arith.addf %206, %207 : vector<17x110xf32>
    %209 = vector.extract_strided_slice %208 {offsets = [0, 0], sizes = [16, 110], strides = [1, 1]} : vector<17x110xf32> to vector<16x110xf32>
    %210 = vector.extract_strided_slice %181 {offsets = [16, 0], sizes = [16, 110], strides = [1, 1]} : vector<32x110xf32> to vector<16x110xf32>
    %211 = arith.addf %209, %210 : vector<16x110xf32>
    %212 = vector.extract_strided_slice %196 {offsets = [0, 0], sizes = [31, 110], strides = [1, 1]} : vector<32x110xf32> to vector<31x110xf32>
    %213 = vector.extract_strided_slice %196 {offsets = [1, 0], sizes = [31, 110], strides = [1, 1]} : vector<32x110xf32> to vector<31x110xf32>
    %214 = arith.maximumf %212, %213 : vector<31x110xf32>
    %215 = vector.extract_strided_slice %214 {offsets = [0, 0], sizes = [29, 110], strides = [1, 1]} : vector<31x110xf32> to vector<29x110xf32>
    %216 = vector.extract_strided_slice %214 {offsets = [2, 0], sizes = [29, 110], strides = [1, 1]} : vector<31x110xf32> to vector<29x110xf32>
    %217 = arith.maximumf %215, %216 : vector<29x110xf32>
    %218 = vector.extract_strided_slice %217 {offsets = [0, 0], sizes = [25, 110], strides = [1, 1]} : vector<29x110xf32> to vector<25x110xf32>
    %219 = vector.extract_strided_slice %217 {offsets = [4, 0], sizes = [25, 110], strides = [1, 1]} : vector<29x110xf32> to vector<25x110xf32>
    %220 = arith.maximumf %218, %219 : vector<25x110xf32>
    %221 = vector.extract_strided_slice %220 {offsets = [0, 0], sizes = [17, 110], strides = [1, 1]} : vector<25x110xf32> to vector<17x110xf32>
    %222 = vector.extract_strided_slice %220 {offsets = [8, 0], sizes = [17, 110], strides = [1, 1]} : vector<25x110xf32> to vector<17x110xf32>
    %223 = arith.maximumf %221, %222 : vector<17x110xf32>
    %224 = vector.extract_strided_slice %223 {offsets = [0, 0], sizes = [16, 110], strides = [1, 1]} : vector<17x110xf32> to vector<16x110xf32>
    %225 = vector.extract_strided_slice %196 {offsets = [16, 0], sizes = [16, 110], strides = [1, 1]} : vector<32x110xf32> to vector<16x110xf32>
    %226 = arith.maximumf %224, %225 : vector<16x110xf32>
    %cst_19 = arith.constant 0.00346020772 : f32
    %227 = vector.broadcast %cst_19 : f32 to vector<16x110xf32>
    %228 = arith.mulf %211, %227 : vector<16x110xf32>
    %229 = arith.subf %226, %228 : vector<16x110xf32>
    %cst_20 = arith.constant 0.000000e+00 : f32
    %230 = vector.broadcast %cst_20 : f32 to vector<16x110xf32>
    %231 = arith.select %57, %229, %230 : vector<16x110xi1>, vector<16x110xf32>
    %c0_21 = arith.constant 0 : index
    %232 = arith.index_cast %c1_i32 : i32 to index
    %c0_22 = arith.constant 0 : index
    %c0_23 = arith.constant 0 : index
    %233 = vector.load %arg3[%c0_21, %232, %c0_22, %c0_23] : memref<1x2x16x110xf32, #tpu.memory_space<vmem>>, vector<1x1x16x110xf32>
    %234 = vector.shape_cast %233 : vector<1x1x16x110xf32> to vector<16x110xf32>
    %235 = arith.addf %234, %231 : vector<16x110xf32>
    %c0_24 = arith.constant 0 : index
    %236 = arith.index_cast %c1_i32 : i32 to index
    %c0_25 = arith.constant 0 : index
    %c0_26 = arith.constant 0 : index
    %237 = vector.load %arg3[%c0_24, %236, %c0_25, %c0_26] : memref<1x2x16x110xf32, #tpu.memory_space<vmem>>, vector<1x1x16x110xf32>
    %238 = vector.shape_cast %237 : vector<1x1x16x110xf32> to vector<16x110xf32>
    %239 = vector.shape_cast %235 : vector<16x110xf32> to vector<1x1x16x110xf32>
    tpu.vector_store %arg3[%c0_24, %236, %c0_25, %c0_26], %239 {strides = array<i32>} : memref<1x2x16x110xf32, #tpu.memory_space<vmem>>, vector<1x1x16x110xf32>,
    %c2_i32 = arith.constant 2 : i32
    return
  }
  func.func @transform_0(%arg0: i32, %arg1: i32) -> (i32, i32, i32) {
    %c1_i32 = arith.constant 1 : i32
    %0 = arith.muli %arg0, %c1_i32 : i32
    %1 = arith.addi %0, %arg1 : i32
    %c0_i32 = arith.constant 0 : i32
    %c0_i32_0 = arith.constant 0 : i32
    %c0_i32_1 = arith.constant 0 : i32
    return %1, %c0_i32, %c0_i32_0 : i32, i32, i32
  }
  func.func @transform_1(%arg0: i32, %arg1: i32) -> (i32, i32, i32, i32) {
    %c0_i32 = arith.constant 0 : i32
    %c0_i32_0 = arith.constant 0 : i32
    %c0_i32_1 = arith.constant 0 : i32
    %c0_i32_2 = arith.constant 0 : i32
    return %arg0, %c0_i32, %c0_i32_0, %c0_i32_1 : i32, i32, i32, i32
  }
}

</mosaic_0001>

<llo_original>
// kernel: peaky_loss.1
$region0: #{peaky_loss.1}
  #allocation0 [shape = 'u32[]', space=smem, size = 0x4, offset = 0x4, fixed_abs, tag = 'smem constant byte address 0x4 - core index']
  #allocation1 [shape = 'u32[144,128]{1,0:T(1,128)}', space=vmem, size = 0x12000, scoped, tag = 'internal scratch']
  %s0 = inlined_call_operand.vmem [shape: f32[4,40,128], index: 0, kind: input, shape index: {}]
  %s1 = inlined_call_operand.vmem [shape: f32[2,2,16,110], index: 1, kind: output, shape index: {}]
  %s2 = sld [smem:[#allocation0]]
  $region41: #{peaky_loss.1} parent=0
    _
  %s4 = ssub.s32 1, %s2
  %s5 = scalar_select 0, %s4, %s2
  loop: start=0, step=1, limit=4
  $region2: #{peaky_loss.1} parent=0 // loop_pre_header
    _
  $region3: #{peaky_loss.1} parent=0 // loop_header
    %s7 = sphi 0, %s11
    %p8 = scmp.ge.s32.totalorder %s7, 4
    %s14 = sphi 0, %s26
    %s15 = sphi 0, %s22
    %s16 = sphi 0, %s14
    %s17 = sphi 0, %s15
    %s18 = sphi 0, %s16
    %s19 = sphi 0, %s17
    %s31 = sphi 0, %s33
    %s34 = sphi 0, %s31
    %s35 = sphi 0, %s34
    %s51 = sphi 0, %s35
    %s57 = sphi 0, %s59
    %s60 = sphi 0, %s57
    %s61 = sphi 0, %s60
    %s77 = sphi 0, %s61
  $region4: #{peaky_loss.1} parent=0 // loop_header_branch
    %10 = sbr.rel (%p8) target = $region8
  $region5: #{peaky_loss.1} parent=0 // loop_body
    %s12 = ssub.s32 %s7, 1
    %s13 = ssub.s32 %s7, 2
    %s20 = sadd.s32 1, %s15
    %p21 = scmp.ge.s32.totalorder %s20, 1
    %s22 = scalar_select %p21, 0, %s20
    %s23 = sadd.s32 1, %s14
    %s24 = scalar_select %p21, %s23, %s14
    %p25 = scmp.ge.s32.totalorder %s24, 2
    %s26 = scalar_select %p25, 0, %s24
    %s27 = sadd.s32 %s14, %s15
    %s28 = sadd.s32 %s26, %s22
    %s29 = ssub.s32 %s27, %s28
    %p30 = scmp.eq.s32.totalorder %s29, 0
    %s32 = sadd.s32 %s31, 1
    %s33 = scalar_select %p30, %s31, %s32
    %p36 = pneg %p30
    %p37 = scmp.eq.s32.totalorder %s7, 1
    %p38 = por %p36, %p37
    %p39 = scmp.ne.s32.totalorder %s31, %s34
    %p40 = scmp.eq.s32.totalorder %s7, 0
    %p41 = por %p39, %p40
    %p42 = scmp.ne.s32.totalorder %s31, %s34
    %p43 = scmp.eq.s32.totalorder %s12, 1
    %p44 = por %p42, %p43
    %p45 = scmp.ne.s32.totalorder %s34, %s35
    %p46 = scmp.eq.s32.totalorder %s12, 0
    %p47 = por %p45, %p46
    %p48 = scmp.ne.s32.totalorder %s34, %s35
    %p49 = scmp.eq.s32.totalorder %s13, 1
    %p50 = por %p48, %p49
    %p52 = scmp.ne.s32.totalorder %s35, %s51
    %p53 = scmp.eq.s32.totalorder %s13, 0
    %p54 = por %p52, %p53
    %s55 = ssub.s32 %s14, %s26
    %p56 = scmp.eq.s32.totalorder %s55, 0
    %s58 = sadd.s32 %s57, 1
    %s59 = scalar_select %p56, %s57, %s58
    %p62 = pneg %p56
    %p63 = scmp.eq.s32.totalorder %s7, 1
    %p64 = por %p62, %p63
    %p65 = scmp.ne.s32.totalorder %s57, %s60
    %p66 = scmp.eq.s32.totalorder %s7, 0
    %p67 = por %p65, %p66
    %p68 = scmp.ne.s32.totalorder %s57, %s60
    %p69 = scmp.eq.s32.totalorder %s12, 1
    %p70 = por %p68, %p69
    %p71 = scmp.ne.s32.totalorder %s60, %s61
    %p72 = scmp.eq.s32.totalorder %s12, 0
    %p73 = por %p71, %p72
    %p74 = scmp.ne.s32.totalorder %s60, %s61
    %p75 = scmp.eq.s32.totalorder %s13, 1
    %p76 = por %p74, %p75
    %p78 = scmp.ne.s32.totalorder %s61, %s77
    %p79 = scmp.eq.s32.totalorder %s13, 0
    %p80 = por %p78, %p79
    %p81 = scmp.le.s32.totalorder 1, %s7
    %p82 = scmp.lt.s32.totalorder %s7, 3
    %p83 = pnand %p81, %p82
    %p84 = pneg %p83
    // Predicated region
    $region9: #{peaky_loss.1} parent=5 // pred_check
      _
    $region10: #{peaky_loss.1} parent=5 // pred_check_branch
      %86 = sbr.rel (%p83) target = $region12
    $region11: #{peaky_loss.1} parent=5 // pred_region
      %s87 = ssub.s32 %s7, 1
    $region12: #{peaky_loss.1} parent=5 // pred_fallthru
      _
    %p88 = scmp.lt.s32.totalorder %s7, 2
    // Predicated region
    $region13: #{peaky_loss.1} parent=5 // pred_check
      %p89 = pneg %p88
    $region14: #{peaky_loss.1} parent=5 // pred_check_branch
      %91 = sbr.rel (%p89) target = $region16
    $region15: #{peaky_loss.1} parent=5 // pred_region
      // Predicated region
      $region17: #{peaky_loss.1} parent=15 // pred_check
        %p92 = pneg %p41
      $region18: #{peaky_loss.1} parent=15 // pred_check_branch
        %94 = sbr.rel (%p92) target = $region20
      $region19: #{peaky_loss.1} parent=15 // pred_region
        %s95 = sadd.s32 %s14, %s15
        %s96 = smul.u32 2, %s95
        %p97 = scmp.lt.s32.totalorder %s96, 3
        %s98 = scalar_select %p97, %s96, 3
        %s99 = smul.addr %s98, 5
        %s100 = smul.addr %s99, 8
        %s101 = scalar_lea.vmem %s0, %s100
        %s102 = sadd.s32 %s14, %s15
        %s103 = smul.u32 2, %s102
      $region20: #{peaky_loss.1} parent=15 // pred_fallthru
        _
    $region16: #{peaky_loss.1} parent=5 // pred_fallthru
      _
    %p104 = scmp.le.s32.totalorder 1, %s7
    %p105 = scmp.lt.s32.totalorder %s7, 3
    %p106 = pnand %p104, %p105
    %p107 = pneg %p106
    // Predicated region
    $region21: #{peaky_loss.1} parent=5 // pred_check
      _
    $region22: #{peaky_loss.1} parent=5 // pred_check_branch
      %109 = sbr.rel (%p106) target = $region24
    $region23: #{peaky_loss.1} parent=5 // pred_region
      %s110 = ssub.s32 %s7, 1
      %s111 = sadd.s32 %s16, %s17
      %s112 = smul.u32 2, %s111
      %p113 = scmp.lt.s32.totalorder %s112, 3
      %s114 = scalar_select %p113, %s112, 3
      %s115 = smul.addr %s114, 5
      %s116 = smul.addr %s115, 8
      %s117 = scalar_lea.vmem %s0, %s116
      %p118 = pneg %p47
      %p119 = pneg %p44
      %p120 = pneg %p73
      %p121 = pneg %p70
      %p122 = scmp.lt.s32.totalorder %s16, 1
      %s123 = scalar_select %p122, %s16, 1
      %s124 = smul.addr %s123, 4
      %s125 = smul.addr %s124, 8
      %s126 = scalar_lea.vmem %s1, %s125
      %s127 = sadd.s32 %s16, %s17
      %s128 = smul.u32 2, %s127
      %p129 = scmp.lt.s32.totalorder %s128, 3
      %s130 = scalar_select %p129, %s128, 3
      %s131 = smul.addr %s130, 5
      %s132 = smul.addr %s131, 8
      %s133 = scalar_lea.vmem %s0, %s132
      %s134 = sadd.s32 %s16, %s17
      %s135 = smul.u32 2, %s134
      %p136 = scmp.lt.s32.totalorder %s16, 1
      %s137 = scalar_select %p136, %s16, 1
      %s138 = smul.addr %s137, 4
      %s139 = smul.addr %s138, 8
      %s140 = scalar_lea.vmem %s1, %s139
      %p141 = scmp.eq.s32.totalorder %s17, 0
      // Predicated region
      $region25: #{peaky_loss.1} parent=23 // pred_check
        %p142 = pneg %p141
      $region26: #{peaky_loss.1} parent=23 // pred_check_branch
        %144 = sbr.rel (%p142) target = $region28
      $region27: #{peaky_loss.1} parent=23 // pred_region
        %vm145 = vcmask 900096
        %146 = vst.msk [vmem:[%s140] sm:$0xff] %vm145, 0.0
        %147 = vst.msk [vmem:[%s140 + $0x8] sm:$0xff] %vm145, 0.0
        %148 = vst.msk [vmem:[%s140 + $0x10] sm:$0xff] %vm145, 0.0
        %149 = vst.msk [vmem:[%s140 + $0x18] sm:$0xff] %vm145, 0.0
      $region28: #{peaky_loss.1} parent=23 // pred_fallthru
        _
      %v150 = vlaneseq
      %v151 = vshrl.u32 %v150, 7
      %v152 = vadd.s32 %v151, 8
      %v153 = vadd.s32 %v151, 16
      %v154 = vadd.s32 %v151, 24
      %v155 = vlaneseq
      %v156 = vand.u32 %v155, 127
      %vm157 = vcmp.ge.s32.totalorder %v151, 8
      %vm158 = vcmp.ge.s32.totalorder %v152, 8
      %vm159 = vcmp.ge.s32.totalorder %v153, 8
      %vm160 = vcmp.ge.s32.totalorder %v154, 8
      %vm161 = vcmp.lt.s32.totalorder %v151, 24
      %vm162 = vcmp.lt.s32.totalorder %v152, 24
      %vm163 = vcmp.lt.s32.totalorder %v153, 24
      %vm164 = vcmp.lt.s32.totalorder %v154, 24
      %vm165 = vmand %vm157, %vm161
      %vm166 = vmand %vm158, %vm162
      %vm167 = vmand %vm159, %vm163
      %vm168 = vmand %vm160, %vm164
      %vm169 = vcmp.ge.s32.totalorder %v156, 8
      %vm170 = vcmp.lt.s32.totalorder %v156, 24
      %vm171 = vmand %vm169, %vm170
      %vm172 = vcmp.ge.s32.totalorder %v156, 33
      %vm173 = vcmp.lt.s32.totalorder %v156, 49
      %vm174 = vmand %vm172, %vm173
      %vm175 = vcmp.ge.s32.totalorder %v156, 58
      %vm176 = vcmp.lt.s32.totalorder %v156, 74
      %vm177 = vmand %vm175, %vm176
      %vm178 = vcmp.ge.s32.totalorder %v156, 83
      %vm179 = vcmp.lt.s32.totalorder %v156, 99
      %vm180 = vmand %vm178, %vm179
      %vm181 = vmor %vm171, %vm174
      %vm182 = vmor %vm181, %vm177
      %vm183 = vmor %vm182, %vm180
      %vm184 = vmand %vm165, %vm183
      %vm185 = vmand %vm166, %vm183
      %vm186 = vmand %vm167, %vm183
      %vm187 = vmand %vm168, %vm183
      %vm188 = vcmp.ge.s32.totalorder %v156, 0
      %vm189 = vcmp.lt.s32.totalorder %v156, 16
      %vm190 = vmand %vm188, %vm189
      %vm191 = vcmp.ge.s32.totalorder %v156, 25
      %vm192 = vcmp.lt.s32.totalorder %v156, 41
      %vm193 = vmand %vm191, %vm192
      %vm194 = vcmp.ge.s32.totalorder %v156, 50
      %vm195 = vcmp.lt.s32.totalorder %v156, 66
      %vm196 = vmand %vm194, %vm195
      %vm197 = vcmp.ge.s32.totalorder %v156, 75
      %vm198 = vcmp.lt.s32.totalorder %v156, 91
      %vm199 = vmand %vm197, %vm198
      %vm200 = vmor %vm190, %vm193
      %vm201 = vmor %vm200, %vm196
      %vm202 = vmor %vm201, %vm199
      %v203 = vld [vmem:[%s133] sm:$0xff]
      %v204 = vld [vmem:[%s133 + $0x8] sm:$0xff]
      %v205 = vld [vmem:[%s133 + $0x10] sm:$0xff]
      %v206 = vld [vmem:[%s133 + $0x18] sm:$0xff]
      %v207 = vld [vmem:[%s133 + $0x20] sm:$0xff]
      %213 = vrot.lane.b32.xlu0 %v203, 127
      %v214 = vpop.permute.xlu0 %213
      %215 = vrot.lane.b32.xlu0 %v204, 127
      %v216 = vpop.permute.xlu0 %215
      %217 = vrot.lane.b32.xlu0 %v205, 127
      %v218 = vpop.permute.xlu0 %217
      %219 = vrot.lane.b32.xlu0 %v206, 127
      %v220 = vpop.permute.xlu0 %219
      %221 = vrot.lane.b32.xlu0 %v207, 127
      %v222 = vpop.permute.xlu0 %221
      %v228 = vadd.f32 %v203, %v214
      %v229 = vadd.f32 %v204, %v216
      %v230 = vadd.f32 %v205, %v218
      %v231 = vadd.f32 %v206, %v220
      %v232 = vadd.f32 %v207, %v222
      %233 = vrot.lane.b32.xlu0 %v203, 126
      %v234 = vpop.permute.xlu0 %233
      %235 = vrot.lane.b32.xlu0 %v204, 126
      %v236 = vpop.permute.xlu0 %235
      %237 = vrot.lane.b32.xlu0 %v205, 126
      %v238 = vpop.permute.xlu0 %237
      %239 = vrot.lane.b32.xlu0 %v206, 126
      %v240 = vpop.permute.xlu0 %239
      %241 = vrot.lane.b32.xlu0 %v207, 126
      %v242 = vpop.permute.xlu0 %241
      %v248 = vadd.f32 %v228, %v234
      %v249 = vadd.f32 %v229, %v236
      %v250 = vadd.f32 %v230, %v238
      %v251 = vadd.f32 %v231, %v240
      %v252 = vadd.f32 %v232, %v242
      %vm258 = vcmask 1046528
      %v259 = vrot.slane %v248, 1
      %v260 = vrot.slane %v249, 1
      %v261 = vsel %vm258, %v259, %v260
      %v262 = vrot.slane %v250, 1
      %v263 = vsel %vm258, %v260, %v262
      %v264 = vrot.slane %v251, 1
      %v265 = vsel %vm258, %v262, %v264
      %v266 = vrot.slane %v252, 1
      %v267 = vsel %vm258, %v264, %v266
      %v272 = vadd.f32 %v248, %v261
      %v273 = vadd.f32 %v249, %v263
      %v274 = vadd.f32 %v250, %v265
      %v275 = vadd.f32 %v251, %v267
      %vm276 = vcmask 1045504
      %v277 = vrot.slane %v248, 2
      %v278 = vrot.slane %v249, 2
      %v279 = vsel %vm276, %v277, %v278
      %v280 = vrot.slane %v250, 2
      %v281 = vsel %vm276, %v278, %v280
      %v282 = vrot.slane %v251, 2
      %v283 = vsel %vm276, %v280, %v282
      %v284 = vrot.slane %v252, 2
      %v285 = vsel %vm276, %v282, %v284
      %v290 = vadd.f32 %v272, %v279
      %v291 = vadd.f32 %v273, %v281
      %v292 = vadd.f32 %v274, %v283
      %v293 = vadd.f32 %v275, %v285
      %v294 = vsel %vm184, %v290, 0.0
      %v295 = vsel %vm185, %v291, 0.0
      %v296 = vsel %vm186, %v292, 0.0
      %v297 = vsel %vm187, %v293, 0.0
      %v298 = vsel %vm184, %v290, -inf
      %v299 = vsel %vm185, %v291, -inf
      %v300 = vsel %vm186, %v292, -inf
      %v301 = vsel %vm187, %v293, -inf
      %306 = vrot.lane.b32.xlu0 %v294, 127
      %v307 = vpop.permute.xlu0 %306
      %308 = vrot.lane.b32.xlu0 %v295, 127
      %v309 = vpop.permute.xlu0 %308
      %310 = vrot.lane.b32.xlu0 %v296, 127
      %v311 = vpop.permute.xlu0 %310
      %312 = vrot.lane.b32.xlu0 %v297, 127
      %v313 = vpop.permute.xlu0 %312
      %v318 = vadd.f32 %v294, %v307
      %v319 = vadd.f32 %v295, %v309
      %v320 = vadd.f32 %v296, %v311
      %v321 = vadd.f32 %v297, %v313
      %326 = vrot.lane.b32.xlu0 %v318, 126
      %v327 = vpop.permute.xlu0 %326
      %328 = vrot.lane.b32.xlu0 %v319, 126
      %v329 = vpop.permute.xlu0 %328
      %330 = vrot.lane.b32.xlu0 %v320, 126
      %v331 = vpop.permute.xlu0 %330
      %332 = vrot.lane.b32.xlu0 %v321, 126
      %v333 = vpop.permute.xlu0 %332
      %v338 = vadd.f32 %v318, %v327
      %v339 = vadd.f32 %v319, %v329
      %v340 = vadd.f32 %v320, %v331
      %v341 = vadd.f32 %v321, %v333
      %346 = vrot.lane.b32.xlu0 %v338, 124
      %v347 = vpop.permute.xlu0 %346
      %348 = vrot.lane.b32.xlu0 %v339, 124
      %v349 = vpop.permute.xlu0 %348
      %350 = vrot.lane.b32.xlu0 %v340, 124
      %v351 = vpop.permute.xlu0 %350
      %352 = vrot.lane.b32.xlu0 %v341, 124
      %v353 = vpop.permute.xlu0 %352
      %v358 = vadd.f32 %v338, %v347
      %v359 = vadd.f32 %v339, %v349
      %v360 = vadd.f32 %v340, %v351
      %v361 = vadd.f32 %v341, %v353
      %366 = vrot.lane.b32.xlu0 %v358, 120
      %v367 = vpop.permute.xlu0 %366
      %368 = vrot.lane.b32.xlu0 %v359, 120
      %v369 = vpop.permute.xlu0 %368
      %370 = vrot.lane.b32.xlu0 %v360, 120
      %v371 = vpop.permute.xlu0 %370
      %372 = vrot.lane.b32.xlu0 %v361, 120
      %v373 = vpop.permute.xlu0 %372
      %v378 = vadd.f32 %v358, %v367
      %v379 = vadd.f32 %v359, %v369
      %v380 = vadd.f32 %v360, %v371
      %v381 = vadd.f32 %v361, %v373
      %382 = vrot.lane.b32.xlu0 %v294, 112
      %v383 = vpop.permute.xlu0 %382
      %384 = vrot.lane.b32.xlu0 %v295, 112
      %v385 = vpop.permute.xlu0 %384
      %386 = vrot.lane.b32.xlu0 %v296, 112
      %v387 = vpop.permute.xlu0 %386
      %388 = vrot.lane.b32.xlu0 %v297, 112
      %v389 = vpop.permute.xlu0 %388
      %v394 = vadd.f32 %v378, %v383
      %v395 = vadd.f32 %v379, %v385
      %v396 = vadd.f32 %v380, %v387
      %v397 = vadd.f32 %v381, %v389
      %402 = vrot.lane.b32.xlu0 %v298, 127
      %v403 = vpop.permute.xlu0 %402
      %404 = vrot.lane.b32.xlu0 %v299, 127
      %v405 = vpop.permute.xlu0 %404
      %406 = vrot.lane.b32.xlu0 %v300, 127
      %v407 = vpop.permute.xlu0 %406
      %408 = vrot.lane.b32.xlu0 %v301, 127
      %v409 = vpop.permute.xlu0 %408
      %v414 = vmax.f32 %v298, %v403
      %v415 = vmax.f32 %v299, %v405
      %v416 = vmax.f32 %v300, %v407
      %v417 = vmax.f32 %v301, %v409
      %422 = vrot.lane.b32.xlu0 %v414, 126
      %v423 = vpop.permute.xlu0 %422
      %424 = vrot.lane.b32.xlu0 %v415, 126
      %v425 = vpop.permute.xlu0 %424
      %426 = vrot.lane.b32.xlu0 %v416, 126
      %v427 = vpop.permute.xlu0 %426
      %428 = vrot.lane.b32.xlu0 %v417, 126
      %v429 = vpop.permute.xlu0 %428
      %v434 = vmax.f32 %v414, %v423
      %v435 = vmax.f32 %v415, %v425
      %v436 = vmax.f32 %v416, %v427
      %v437 = vmax.f32 %v417, %v429
      %442 = vrot.lane.b32.xlu0 %v434, 124
      %v443 = vpop.permute.xlu0 %442
      %444 = vrot.lane.b32.xlu0 %v435, 124
      %v445 = vpop.permute.xlu0 %444
      %446 = vrot.lane.b32.xlu0 %v436, 124
      %v447 = vpop.permute.xlu0 %446
      %448 = vrot.lane.b32.xlu0 %v437, 124
      %v449 = vpop.permute.xlu0 %448
      %v454 = vmax.f32 %v434, %v443
      %v455 = vmax.f32 %v435, %v445
      %v456 = vmax.f32 %v436, %v447
      %v457 = vmax.f32 %v437, %v449
      %462 = vrot.lane.b32.xlu0 %v454, 120
      %v463 = vpop.permute.xlu0 %462
      %464 = vrot.lane.b32.xlu0 %v455, 120
      %v465 = vpop.permute.xlu0 %464
      %466 = vrot.lane.b32.xlu0 %v456, 120
      %v467 = vpop.permute.xlu0 %466
      %468 = vrot.lane.b32.xlu0 %v457, 120
      %v469 = vpop.permute.xlu0 %468
      %v474 = vmax.f32 %v454, %v463
      %v475 = vmax.f32 %v455, %v465
      %v476 = vmax.f32 %v456, %v467
      %v477 = vmax.f32 %v457, %v469
      %478 = vrot.lane.b32.xlu0 %v298, 112
      %v479 = vpop.permute.xlu0 %478
      %480 = vrot.lane.b32.xlu0 %v299, 112
      %v481 = vpop.permute.xlu0 %480
      %482 = vrot.lane.b32.xlu0 %v300, 112
      %v483 = vpop.permute.xlu0 %482
      %484 = vrot.lane.b32.xlu0 %v301, 112
      %v485 = vpop.permute.xlu0 %484
      %v490 = vmax.f32 %v474, %v479
      %v491 = vmax.f32 %v475, %v481
      %v492 = vmax.f32 %v476, %v483
      %v493 = vmax.f32 %v477, %v485
      %v498 = vrot.slane %v394, 1
      %v499 = vrot.slane %v395, 1
      %v500 = vsel %vm258, %v498, %v499
      %v501 = vrot.slane %v396, 1
      %v502 = vsel %vm258, %v499, %v501
      %v503 = vrot.slane %v397, 1
      %v504 = vsel %vm258, %v501, %v503
      %v509 = vadd.f32 %v394, %v500
      %v510 = vadd.f32 %v395, %v502
      %v511 = vadd.f32 %v396, %v504
      %v512 = vadd.f32 %v397, %v503
      %v517 = vrot.slane %v509, 2
      %v518 = vrot.slane %v510, 2
      %v519 = vsel %vm276, %v517, %v518
      %v520 = vrot.slane %v511, 2
      %v521 = vsel %vm276, %v518, %v520
      %v522 = vrot.slane %v512, 2
      %v523 = vsel %vm276, %v520, %v522
      %v528 = vadd.f32 %v509, %v519
      %v529 = vadd.f32 %v510, %v521
      %v530 = vadd.f32 %v511, %v523
      %v531 = vadd.f32 %v512, %v522
      %vm536 = vcmask 1043456
      %v537 = vrot.slane %v528, 4
      %v538 = vrot.slane %v529, 4
      %v539 = vsel %vm536, %v537, %v538
      %v540 = vrot.slane %v530, 4
      %v541 = vsel %vm536, %v538, %v540
      %v542 = vrot.slane %v531, 4
      %v543 = vsel %vm536, %v540, %v542
      %v547 = vadd.f32 %v528, %v539
      %v548 = vadd.f32 %v529, %v541
      %v549 = vadd.f32 %v530, %v543
      %v550 = vadd.f32 %v547, %v548
      %v551 = vadd.f32 %v548, %v549
      %v552 = vadd.f32 %v550, %v396
      %v553 = vadd.f32 %v551, %v397
      %v558 = vrot.slane %v490, 1
      %v559 = vrot.slane %v491, 1
      %v560 = vsel %vm258, %v558, %v559
      %v561 = vrot.slane %v492, 1
      %v562 = vsel %vm258, %v559, %v561
      %v563 = vrot.slane %v493, 1
      %v564 = vsel %vm258, %v561, %v563
      %v569 = vmax.f32 %v490, %v560
      %v570 = vmax.f32 %v491, %v562
      %v571 = vmax.f32 %v492, %v564
      %v572 = vmax.f32 %v493, %v563
      %v577 = vrot.slane %v569, 2
      %v578 = vrot.slane %v570, 2
      %v579 = vsel %vm276, %v577, %v578
      %v580 = vrot.slane %v571, 2
      %v581 = vsel %vm276, %v578, %v580
      %v582 = vrot.slane %v572, 2
      %v583 = vsel %vm276, %v580, %v582
      %v588 = vmax.f32 %v569, %v579
      %v589 = vmax.f32 %v570, %v581
      %v590 = vmax.f32 %v571, %v583
      %v591 = vmax.f32 %v572, %v582
      %v596 = vrot.slane %v588, 4
      %v597 = vrot.slane %v589, 4
      %v598 = vsel %vm536, %v596, %v597
      %v599 = vrot.slane %v590, 4
      %v600 = vsel %vm536, %v597, %v599
      %v601 = vrot.slane %v591, 4
      %v602 = vsel %vm536, %v599, %v601
      %v606 = vmax.f32 %v588, %v598
      %v607 = vmax.f32 %v589, %v600
      %v608 = vmax.f32 %v590, %v602
      %v609 = vmax.f32 %v606, %v607
      %v610 = vmax.f32 %v607, %v608
      %v611 = vmax.f32 %v609, %v492
      %v612 = vmax.f32 %v610, %v493
      %v613 = vmul.f32 %v552, 0.0034602077
      %v614 = vmul.f32 %v553, 0.0034602077
      %v615 = vsub.f32 %v611, %v613
      %v616 = vsub.f32 %v612, %v614
      %v617 = vsel %vm202, %v615, 0.0
      %v618 = vsel %vm202, %v616, 0.0
      %v619 = vld [vmem:[%s140] sm:$0xff]
      %v620 = vld [vmem:[%s140 + $0x8] sm:$0xff]
      %v621 = vadd.f32 %v619, %v617
      %v622 = vadd.f32 %v620, %v618
      %vm623 = vcmask 900096
      %624 = vst.msk [vmem:[%s140] sm:$0xff] %vm623, %v621
      %625 = vst.msk [vmem:[%s140 + $0x8] sm:$0xff] %vm623, %v622
      %s626 = scalar_lea.vmem %s133, 40
      %v627 = vld [vmem:[%s626] sm:$0xff]
      %v628 = vld [vmem:[%s626 + $0x8] sm:$0xff]
      %v629 = vld [vmem:[%s626 + $0x10] sm:$0xff]
      %v630 = vld [vmem:[%s626 + $0x18] sm:$0xff]
      %v631 = vld [vmem:[%s626 + $0x20] sm:$0xff]
      %637 = vrot.lane.b32.xlu0 %v627, 127
      %v638 = vpop.permute.xlu0 %637
      %639 = vrot.lane.b32.xlu0 %v628, 127
      %v640 = vpop.permute.xlu0 %639
      %641 = vrot.lane.b32.xlu0 %v629, 127
      %v642 = vpop.permute.xlu0 %641
      %643 = vrot.lane.b32.xlu0 %v630, 127
      %v644 = vpop.permute.xlu0 %643
      %645 = vrot.lane.b32.xlu0 %v631, 127
      %v646 = vpop.permute.xlu0 %645
      %v652 = vadd.f32 %v627, %v638
      %v653 = vadd.f32 %v628, %v640
      %v654 = vadd.f32 %v629, %v642
      %v655 = vadd.f32 %v630, %v644
      %v656 = vadd.f32 %v631, %v646
      %657 = vrot.lane.b32.xlu0 %v627, 126
      %v658 = vpop.permute.xlu0 %657
      %659 = vrot.lane.b32.xlu0 %v628, 126
      %v660 = vpop.permute.xlu0 %659
      %661 = vrot.lane.b32.xlu0 %v629, 126
      %v662 = vpop.permute.xlu0 %661
      %663 = vrot.lane.b32.xlu0 %v630, 126
      %v664 = vpop.permute.xlu0 %663
      %665 = vrot.lane.b32.xlu0 %v631, 126
      %v666 = vpop.permute.xlu0 %665
      %v672 = vadd.f32 %v652, %v658
      %v673 = vadd.f32 %v653, %v660
      %v674 = vadd.f32 %v654, %v662
      %v675 = vadd.f32 %v655, %v664
      %v676 = vadd.f32 %v656, %v666
      %v682 = vrot.slane %v672, 1
      %v683 = vrot.slane %v673, 1
      %v684 = vsel %vm258, %v682, %v683
      %v685 = vrot.slane %v674, 1
      %v686 = vsel %vm258, %v683, %v685
      %v687 = vrot.slane %v675, 1
      %v688 = vsel %vm258, %v685, %v687
      %v689 = vrot.slane %v676, 1
      %v690 = vsel %vm258, %v687, %v689
      %v695 = vadd.f32 %v672, %v684
      %v696 = vadd.f32 %v673, %v686
      %v697 = vadd.f32 %v674, %v688
      %v698 = vadd.f32 %v675, %v690
      %v699 = vrot.slane %v672, 2
      %v700 = vrot.slane %v673, 2
      %v701 = vsel %vm276, %v699, %v700
      %v702 = vrot.slane %v674, 2
      %v703 = vsel %vm276, %v700, %v702
      %v704 = vrot.slane %v675, 2
      %v705 = vsel %vm276, %v702, %v704
      %v706 = vrot.slane %v676, 2
      %v707 = vsel %vm276, %v704, %v706
      %v712 = vadd.f32 %v695, %v701
      %v713 = vadd.f32 %v696, %v703
      %v714 = vadd.f32 %v697, %v705
      %v715 = vadd.f32 %v698, %v707
      %v716 = vsel %vm184, %v712, 0.0
      %v717 = vsel %vm185, %v713, 0.0
      %v718 = vsel %vm186, %v714, 0.0
      %v719 = vsel %vm187, %v715, 0.0
      %v720 = vsel %vm184, %v712, -inf
      %v721 = vsel %vm185, %v713, -inf
      %v722 = vsel %vm186, %v714, -inf
      %v723 = vsel %vm187, %v715, -inf
      %728 = vrot.lane.b32.xlu0 %v716, 127
      %v729 = vpop.permute.xlu0 %728
      %730 = vrot.lane.b32.xlu0 %v717, 127
      %v731 = vpop.permute.xlu0 %730
      %732 = vrot.lane.b32.xlu0 %v718, 127
      %v733 = vpop.permute.xlu0 %732
      %734 = vrot.lane.b32.xlu0 %v719, 127
      %v735 = vpop.permute.xlu0 %734
      %v740 = vadd.f32 %v716, %v729
      %v741 = vadd.f32 %v717, %v731
      %v742 = vadd.f32 %v718, %v733
      %v743 = vadd.f32 %v719, %v735
      %748 = vrot.lane.b32.xlu0 %v740, 126
      %v749 = vpop.permute.xlu0 %748
      %750 = vrot.lane.b32.xlu0 %v741, 126
      %v751 = vpop.permute.xlu0 %750
      %752 = vrot.lane.b32.xlu0 %v742, 126
      %v753 = vpop.permute.xlu0 %752
      %754 = vrot.lane.b32.xlu0 %v743, 126
      %v755 = vpop.permute.xlu0 %754
      %v760 = vadd.f32 %v740, %v749
      %v761 = vadd.f32 %v741, %v751
      %v762 = vadd.f32 %v742, %v753
      %v763 = vadd.f32 %v743, %v755
      %768 = vrot.lane.b32.xlu0 %v760, 124
      %v769 = vpop.permute.xlu0 %768
      %770 = vrot.lane.b32.xlu0 %v761, 124
      %v771 = vpop.permute.xlu0 %770
      %772 = vrot.lane.b32.xlu0 %v762, 124
      %v773 = vpop.permute.xlu0 %772
      %774 = vrot.lane.b32.xlu0 %v763, 124
      %v775 = vpop.permute.xlu0 %774
      %v780 = vadd.f32 %v760, %v769
      %v781 = vadd.f32 %v761, %v771
      %v782 = vadd.f32 %v762, %v773
      %v783 = vadd.f32 %v763, %v775
      %788 = vrot.lane.b32.xlu0 %v780, 120
      %v789 = vpop.permute.xlu0 %788
      %790 = vrot.lane.b32.xlu0 %v781, 120
      %v791 = vpop.permute.xlu0 %790
      %792 = vrot.lane.b32.xlu0 %v782, 120
      %v793 = vpop.permute.xlu0 %792
      %794 = vrot.lane.b32.xlu0 %v783, 120
      %v795 = vpop.permute.xlu0 %794
      %v800 = vadd.f32 %v780, %v789
      %v801 = vadd.f32 %v781, %v791
      %v802 = vadd.f32 %v782, %v793
      %v803 = vadd.f32 %v783, %v795
      %804 = vrot.lane.b32.xlu0 %v716, 112
      %v805 = vpop.permute.xlu0 %804
      %806 = vrot.lane.b32.xlu0 %v717, 112
      %v807 = vpop.permute.xlu0 %806
      %808 = vrot.lane.b32.xlu0 %v718, 112
      %v809 = vpop.permute.xlu0 %808
      %810 = vrot.lane.b32.xlu0 %v719, 112
      %v811 = vpop.permute.xlu0 %810
      %v816 = vadd.f32 %v800, %v805
      %v817 = vadd.f32 %v801, %v807
      %v818 = vadd.f32 %v802, %v809
      %v819 = vadd.f32 %v803, %v811
      %824 = vrot.lane.b32.xlu0 %v720, 127
      %v825 = vpop.permute.xlu0 %824
      %826 = vrot.lane.b32.xlu0 %v721, 127
      %v827 = vpop.permute.xlu0 %826
      %828 = vrot.lane.b32.xlu0 %v722, 127
      %v829 = vpop.permute.xlu0 %828
      %830 = vrot.lane.b32.xlu0 %v723, 127
      %v831 = vpop.permute.xlu0 %830
      %v836 = vmax.f32 %v720, %v825
      %v837 = vmax.f32 %v721, %v827
      %v838 = vmax.f32 %v722, %v829
      %v839 = vmax.f32 %v723, %v831
      %844 = vrot.lane.b32.xlu0 %v836, 126
      %v845 = vpop.permute.xlu0 %844
      %846 = vrot.lane.b32.xlu0 %v837, 126
      %v847 = vpop.permute.xlu0 %846
      %848 = vrot.lane.b32.xlu0 %v838, 126
      %v849 = vpop.permute.xlu0 %848
      %850 = vrot.lane.b32.xlu0 %v839, 126
      %v851 = vpop.permute.xlu0 %850
      %v856 = vmax.f32 %v836, %v845
      %v857 = vmax.f32 %v837, %v847
      %v858 = vmax.f32 %v838, %v849
      %v859 = vmax.f32 %v839, %v851
      %864 = vrot.lane.b32.xlu0 %v856, 124
      %v865 = vpop.permute.xlu0 %864
      %866 = vrot.lane.b32.xlu0 %v857, 124
      %v867 = vpop.permute.xlu0 %866
      %868 = vrot.lane.b32.xlu0 %v858, 124
      %v869 = vpop.permute.xlu0 %868
      %870 = vrot.lane.b32.xlu0 %v859, 124
      %v871 = vpop.permute.xlu0 %870
      %v876 = vmax.f32 %v856, %v865
      %v877 = vmax.f32 %v857, %v867
      %v878 = vmax.f32 %v858, %v869
      %v879 = vmax.f32 %v859, %v871
      %884 = vrot.lane.b32.xlu0 %v876, 120
      %v885 = vpop.permute.xlu0 %884
      %886 = vrot.lane.b32.xlu0 %v877, 120
      %v887 = vpop.permute.xlu0 %886
      %888 = vrot.lane.b32.xlu0 %v878, 120
      %v889 = vpop.permute.xlu0 %888
      %890 = vrot.lane.b32.xlu0 %v879, 120
      %v891 = vpop.permute.xlu0 %890
      %v896 = vmax.f32 %v876, %v885
      %v897 = vmax.f32 %v877, %v887
      %v898 = vmax.f32 %v878, %v889
      %v899 = vmax.f32 %v879, %v891
      %900 = vrot.lane.b32.xlu0 %v720, 112
      %v901 = vpop.permute.xlu0 %900
      %902 = vrot.lane.b32.xlu0 %v721, 112
      %v903 = vpop.permute.xlu0 %902
      %904 = vrot.lane.b32.xlu0 %v722, 112
      %v905 = vpop.permute.xlu0 %904
      %906 = vrot.lane.b32.xlu0 %v723, 112
      %v907 = vpop.permute.xlu0 %906
      %v912 = vmax.f32 %v896, %v901
      %v913 = vmax.f32 %v897, %v903
      %v914 = vmax.f32 %v898, %v905
      %v915 = vmax.f32 %v899, %v907
      %v920 = vrot.slane %v816, 1
      %v921 = vrot.slane %v817, 1
      %v922 = vsel %vm258, %v920, %v921
      %v923 = vrot.slane %v818, 1
      %v924 = vsel %vm258, %v921, %v923
      %v925 = vrot.slane %v819, 1
      %v926 = vsel %vm258, %v923, %v925
      %v931 = vadd.f32 %v816, %v922
      %v932 = vadd.f32 %v817, %v924
      %v933 = vadd.f32 %v818, %v926
      %v934 = vadd.f32 %v819, %v925
      %v939 = vrot.slane %v931, 2
      %v940 = vrot.slane %v932, 2
      %v941 = vsel %vm276, %v939, %v940
      %v942 = vrot.slane %v933, 2
      %v943 = vsel %vm276, %v940, %v942
      %v944 = vrot.slane %v934, 2
      %v945 = vsel %vm276, %v942, %v944
      %v950 = vadd.f32 %v931, %v941
      %v951 = vadd.f32 %v932, %v943
      %v952 = vadd.f32 %v933, %v945
      %v953 = vadd.f32 %v934, %v944
      %v958 = vrot.slane %v950, 4
      %v959 = vrot.slane %v951, 4
      %v960 = vsel %vm536, %v958, %v959
      %v961 = vrot.slane %v952, 4
      %v962 = vsel %vm536, %v959, %v961
      %v963 = vrot.slane %v953, 4
      %v964 = vsel %vm536, %v961, %v963
      %v968 = vadd.f32 %v950, %v960
      %v969 = vadd.f32 %v951, %v962
      %v970 = vadd.f32 %v952, %v964
      %v971 = vadd.f32 %v968, %v969
      %v972 = vadd.f32 %v969, %v970
      %v973 = vadd.f32 %v971, %v818
      %v974 = vadd.f32 %v972, %v819
      %v979 = vrot.slane %v912, 1
      %v980 = vrot.slane %v913, 1
      %v981 = vsel %vm258, %v979, %v980
      %v982 = vrot.slane %v914, 1
      %v983 = vsel %vm258, %v980, %v982
      %v984 = vrot.slane %v915, 1
      %v985 = vsel %vm258, %v982, %v984
      %v990 = vmax.f32 %v912, %v981
      %v991 = vmax.f32 %v913, %v983
      %v992 = vmax.f32 %v914, %v985
      %v993 = vmax.f32 %v915, %v984
      %v998 = vrot.slane %v990, 2
      %v999 = vrot.slane %v991, 2
      %v1000 = vsel %vm276, %v998, %v999
      %v1001 = vrot.slane %v992, 2
      %v1002 = vsel %vm276, %v999, %v1001
      %v1003 = vrot.slane %v993, 2
      %v1004 = vsel %vm276, %v1001, %v1003
      %v1009 = vmax.f32 %v990, %v1000
      %v1010 = vmax.f32 %v991, %v1002
      %v1011 = vmax.f32 %v992, %v1004
      %v1012 = vmax.f32 %v993, %v1003
      %v1017 = vrot.slane %v1009, 4
      %v1018 = vrot.slane %v1010, 4
      %v1019 = vsel %vm536, %v1017, %v1018
      %v1020 = vrot.slane %v1011, 4
      %v1021 = vsel %vm536, %v1018, %v1020
      %v1022 = vrot.slane %v1012, 4
      %v1023 = vsel %vm536, %v1020, %v1022
      %v1027 = vmax.f32 %v1009, %v1019
      %v1028 = vmax.f32 %v1010, %v1021
      %v1029 = vmax.f32 %v1011, %v1023
      %v1030 = vmax.f32 %v1027, %v1028
      %v1031 = vmax.f32 %v1028, %v1029
      %v1032 = vmax.f32 %v1030, %v914
      %v1033 = vmax.f32 %v1031, %v915
      %v1034 = vmul.f32 %v973, 0.0034602077
      %v1035 = vmul.f32 %v974, 0.0034602077
      %v1036 = vsub.f32 %v1032, %v1034
      %v1037 = vsub.f32 %v1033, %v1035
      %v1038 = vsel %vm202, %v1036, 0.0
      %v1039 = vsel %vm202, %v1037, 0.0
      %s1040 = scalar_lea.vmem %s140, 16
      %v1041 = vld [vmem:[%s1040] sm:$0xff]
      %v1042 = vld [vmem:[%s1040 + $0x8] sm:$0xff]
      %v1043 = vadd.f32 %v1041, %v1038
      %v1044 = vadd.f32 %v1042, %v1039
      %1045 = vst.msk [vmem:[%s1040] sm:$0xff] %vm623, %v1043
      %1046 = vst.msk [vmem:[%s1040 + $0x8] sm:$0xff] %vm623, %v1044
      %p1047 = scmp.lt.s32.totalorder %s16, 1
      %s1048 = scalar_select %p1047, %s16, 1
      %s1049 = smul.addr %s1048, 4
      %s1050 = smul.addr %s1049, 8
      %s1051 = scalar_lea.vmem %s1, %s1050
      // Predicated region
      $region29: #{peaky_loss.1} parent=23 // pred_check
        %p1052 = pneg %p70
      $region30: #{peaky_loss.1} parent=23 // pred_check_branch
        %1054 = sbr.rel (%p1052) target = $region32
      $region31: #{peaky_loss.1} parent=23 // pred_region
        _
      $region32: #{peaky_loss.1} parent=23 // pred_fallthru
        _
    $region24: #{peaky_loss.1} parent=5 // pred_fallthru
      _
    %p1055 = scmp.le.s32.totalorder 2, %s7
    // Predicated region
    $region33: #{peaky_loss.1} parent=5 // pred_check
      %p1056 = pneg %p1055
    $region34: #{peaky_loss.1} parent=5 // pred_check_branch
      %1058 = sbr.rel (%p1056) target = $region36
    $region35: #{peaky_loss.1} parent=5 // pred_region
      %s1059 = ssub.s32 %s7, 2
      // Predicated region
      $region37: #{peaky_loss.1} parent=35 // pred_check
        %p1060 = pneg %p76
      $region38: #{peaky_loss.1} parent=35 // pred_check_branch
        %1062 = sbr.rel (%p1060) target = $region40
      $region39: #{peaky_loss.1} parent=35 // pred_region
        %p1063 = scmp.lt.s32.totalorder %s18, 1
        %s1064 = scalar_select %p1063, %s18, 1
        %s1065 = smul.addr %s1064, 4
        %s1066 = smul.addr %s1065, 8
        %s1067 = scalar_lea.vmem %s1, %s1066
      $region40: #{peaky_loss.1} parent=35 // pred_fallthru
        _
    $region36: #{peaky_loss.1} parent=5 // pred_fallthru
      _
  $region6: #{peaky_loss.1} parent=0 // loop_footer
    %s11 = sadd.s32 1, %s7
  $region7: #{peaky_loss.1} parent=0 // loop_footer_branch
    %6 = sbr.rel target = $region3
  $region8: #{peaky_loss.1} parent=0 // loop_exit
    _

</llo_original>
